<compile_context>
chip_gen: v5e
topology: v5e:2x2
jax: 0.10.0
libtpu: 0.0.40
codegen_flags: <defaults>
</compile_context>

<pallas_src>
import jax
import jax.numpy as jnp
from jax.experimental import pallas as pl
from jax.experimental.pallas import tpu as pltpu


def _round_up(v, m):
    return (v + m - 1) // m * m


# ----------------------------- kernels ------------------------------------- #

def _lr_kernel_fused(x_ref, v_ref, u_ref, b_ref, o_ref):
    # x:(TM,IN) v:(IN,NC) u:(NC,OUT) b:(1,OUT) o:(TM,OUT)
    h = jnp.dot(x_ref[...], v_ref[...], preferred_element_type=jnp.float32)
    # Cast h to the weight dtype so bf16 weights hit the native bf16 MXU path
    # (no-op for f32 weights).
    y = jnp.dot(h.astype(u_ref.dtype), u_ref[...],
                preferred_element_type=jnp.float32)
    o_ref[...] = (y + b_ref[...]).astype(o_ref.dtype)


def _lr_kernel_rank_tiled(x_ref, v_ref, u_ref, b_ref, o_ref, acc_ref):
    # Trailing grid axis k tiles the rank (NC) contraction of the second matmul.
    k = pl.program_id(1)

    @pl.when(k == 0)
    def _init():
        acc_ref[...] = jnp.zeros_like(acc_ref)

    h = jnp.dot(x_ref[...], v_ref[...], preferred_element_type=jnp.float32)
    acc_ref[...] += jnp.dot(h.astype(u_ref.dtype), u_ref[...],
                            preferred_element_type=jnp.float32)

    @pl.when(k == pl.num_programs(1) - 1)
    def _finalize():
        o_ref[...] = (acc_ref[...] + b_ref[...]).astype(o_ref.dtype)


# --------------------------- tiling heuristics ------------------------------ #

def _vmem_budgets():
    """(vmem_limit_bytes, our tile budget), derived from the chip when possible."""
    cap = None
    try:
        cap = getattr(pltpu.get_tpu_info(), "vmem_capacity_bytes", None)
    except Exception:
        cap = None
    if not cap:
        cap = 64 * 1024 * 1024        # assume smallest per-core VMEM (v7x)
    limit = int(cap * 3 // 4)         # leave ~25% headroom for Mosaic scratch
    budget = int(cap // 2)            # what our own tile accounting may use
    return limit, budget


def _tile_bytes(tm, tnc, in_p, out_p, x_item, w_item, multi_k):
    b = 2 * tm * in_p * x_item        # streamed x tile (double-buffered)
    b += 2 * tm * out_p * x_item      # streamed out tile
    b += 2 * in_p * tnc * w_item      # V block (Pallas double-buffers even
    b += 2 * tnc * out_p * w_item     # U block  constant-index inputs)
    b += 2 * out_p * 4                # bias (f32)
    b += tm * tnc * (4 + w_item)      # f32 intermediate h + its cast copy
    if multi_k:
        b += tm * out_p * 4           # f32 accumulator scratch
    return b


def _choose_tiles(m, in_p, nc_p, out_p, x_item, w_item, sublane,
                  tm_max, tnc_max, budget):
    def legal_tm(cand):
        # A legal tm is either the full M extent or a sublane multiple.
        if cand >= m:
            return m
        return max(sublane, cand // sublane * sublane)

    tnc = min(nc_p, _round_up(tnc_max, 128))
    tm = legal_tm(tm_max)
    while True:
        multi_k = tnc < nc_p
        if _tile_bytes(tm, tnc, in_p, out_p, x_item, w_item, multi_k) <= budget:
            return tm, tnc
        if tm > min(sublane, m):
            tm = legal_tm(max(1, tm // 2))
        elif tnc > 128:
            tnc = max(128, (tnc // 2) // 128 * 128)
        else:
            raise ValueError(
                "lr_linear_super: minimal tiles do not fit the VMEM budget "
                f"(in_p={in_p}, nc_p={nc_p}, out_p={out_p}, budget={budget}B). "
                "IN/OUT tiling is not implemented yet (see TODO).")


# ------------------------------- wrapper ------------------------------------ #

def lr_linear_super(x, vt_weight, u_weight, bias=None, *,
                    sample_ratio=1.0, tm_max=512, tnc_max=1024):
    """x: (..., in_channel) -> (..., out_channel); y = (x @ VT^T) @ U^T + b."""
    orig_shape = x.shape
    in_ch = orig_shape[-1]
    nc_full, in_ch_w = vt_weight.shape
    out_ch, nc_w = u_weight.shape
    assert in_ch == in_ch_w and nc_full == nc_w

    # Non-adaptive rank sampling (matches adaptive_column=False in PyTorch).
    if sample_ratio != 1.0:
        sample_dim = max(1, int(round(sample_ratio * nc_full)))
        vt_weight = vt_weight[:sample_dim, :]
        u_weight = u_weight[:, :sample_dim]
    nc = vt_weight.shape[0]

    x2d = x.reshape(-1, in_ch)
    m = x2d.shape[0]

    if bias is None:
        bias = jnp.zeros((out_ch,), dtype=jnp.float32)

    # Layout plumbing: (K, N)-laid-out weights -> natural MXU RHS operands.
    v = vt_weight.T        # (IN, NC)
    u = u_weight.T         # (NC, OUT)

    x_item = jnp.dtype(x.dtype).itemsize
    w_item = jnp.dtype(vt_weight.dtype).itemsize
    sublane = max(8, 32 // x_item)       # 8 f32 / 16 bf16 / 32 int8-fp8

    # Lane padding only where the dims aren't already 128-multiples.
    in_p = _round_up(in_ch, 128)
    nc_p = _round_up(nc, 128)
    out_p = _round_up(out_ch, 128)

    vmem_limit, vmem_budget = _vmem_budgets()
    tm, tnc = _choose_tiles(m, in_p, nc_p, out_p, x_item, w_item,
                            sublane, tm_max, tnc_max, vmem_budget)

    # Guarantee >=2 M grid steps for larger M so the "parallel" axis can split
    # across v7x's two TensorCores (harmless on single-TC v5e/v6e).
    if m >= 256 and tm >= m:
        tm = _round_up(-(-m // 2), sublane)

    multi_k = tnc < nc_p
    if multi_k:
        nc_p = _round_up(nc, tnc)   # make the rank dim an exact multiple of tnc

    # Zero padding of lane dims is semantically inert (padded cols/rows add 0).
    # M is never padded and the output is never sliced along M.
    x_p = x2d if in_p == in_ch else jnp.pad(x2d, ((0, 0), (0, in_p - in_ch)))
    v_p = v if (in_p == in_ch and nc_p == nc) else jnp.pad(
        v, ((0, in_p - in_ch), (0, nc_p - nc)))
    u_p = u if (nc_p == nc and out_p == out_ch) else jnp.pad(
        u, ((0, nc_p - nc), (0, out_p - out_ch)))
    b_p = bias.astype(jnp.float32)
    if out_p != out_ch:
        b_p = jnp.pad(b_p, (0, out_p - out_ch))
    b_p = b_p.reshape(1, out_p)

    n_m = pl.cdiv(m, tm)
    flops = 2 * m * (in_p * nc_p + nc_p * out_p)
    bytes_accessed = (x_p.size * x_item + v_p.size * w_item
                      + u_p.size * w_item + b_p.size * 4 + m * out_p * x_item)
    cost = pl.CostEstimate(flops=flops, transcendentals=0,
                           bytes_accessed=bytes_accessed)

    if not multi_k:
        grid_spec = pltpu.PrefetchScalarGridSpec(
            num_scalar_prefetch=0,
            grid=(n_m,),
            in_specs=[
                pl.BlockSpec((tm, in_p), lambda i: (i, 0)),      # streamed x
                pl.BlockSpec((in_p, nc_p), lambda i: (0, 0)),    # resident V
                pl.BlockSpec((nc_p, out_p), lambda i: (0, 0)),   # resident U
                pl.BlockSpec((1, out_p), lambda i: (0, 0)),      # resident bias
            ],
            out_specs=pl.BlockSpec((tm, out_p), lambda i: (i, 0)),
        )
        kernel = _lr_kernel_fused
        semantics = ("parallel",)
    else:
        n_k = nc_p // tnc
        grid_spec = pltpu.PrefetchScalarGridSpec(
            num_scalar_prefetch=0,
            grid=(n_m, n_k),
            in_specs=[
                pl.BlockSpec((tm, in_p), lambda i, k: (i, 0)),   # x, reused over k
                pl.BlockSpec((in_p, tnc), lambda i, k: (0, k)),  # V rank tile
                pl.BlockSpec((tnc, out_p), lambda i, k: (k, 0)), # U rank tile
                pl.BlockSpec((1, out_p), lambda i, k: (0, 0)),   # bias
            ],
            out_specs=pl.BlockSpec((tm, out_p), lambda i, k: (i, 0)),
            scratch_shapes=[pltpu.VMEM((tm, out_p), jnp.float32)],
        )
        kernel = _lr_kernel_rank_tiled
        semantics = ("parallel", "arbitrary")

    out = pl.pallas_call(
        kernel,
        out_shape=jax.ShapeDtypeStruct((m, out_p), x.dtype),
        grid_spec=grid_spec,
        compiler_params=pltpu.CompilerParams(
            dimension_semantics=semantics,
            vmem_limit_bytes=vmem_limit),
        cost_estimate=cost,
    )(x_p, v_p, u_p, b_p)

    if out_p != out_ch:
        out = out[:, :out_ch]
    return out.reshape(*orig_shape[:-1], out_ch)


# ------------------------------- test harness ------------------------------- #

def init_lr_linear_params(key, in_channel, out_channel):
    """Deterministic init mimicking nn.Linear defaults (uniform +/- 1/sqrt(fan_in))."""
    num_components = min(in_channel, out_channel)
    k_vt, k_u, k_b = jax.random.split(key, 3)
    vt_bound = 1.0 / float(in_channel) ** 0.5
    u_bound = 1.0 / float(num_components) ** 0.5
    vt_weight = jax.random.uniform(
        k_vt, (num_components, in_channel), jnp.float32, -vt_bound, vt_bound)
    u_weight = jax.random.uniform(
        k_u, (out_channel, num_components), jnp.float32, -u_bound, u_bound)
    bias = jax.random.uniform(k_b, (out_channel,), jnp.float32, -u_bound, u_bound)
    return vt_weight, u_weight, bias


def _ref_forward(x2d, vt_weight, u_weight, bias=None):
    hi = jax.lax.Precision.HIGHEST
    h = jnp.dot(x2d, vt_weight.T, precision=hi)
    y = jnp.dot(h, u_weight.T, precision=hi)
    if bias is not None:
        y = y + bias[None, :]
    return y


if __name__ == "__main__":
    key = jax.random.PRNGKey(0)
    k1, k2, k3, k4 = jax.random.split(key, 4)

    # Case 1: module-sized shapes (batch=2, seq=8, in_channel=32, out_channel=16).
    batch, seq, cin, cout = 2, 8, 32, 16
    x = jax.random.normal(k1, (batch, seq, cin), jnp.float32)
    vt_w, u_w, b_w = init_lr_linear_params(k2, cin, cout)
    y = jax.block_until_ready(lr_linear_super(x, vt_w, u_w, b_w))
    ref = _ref_forward(x.reshape(-1, cin), vt_w, u_w, b_w).reshape(batch, seq, cout)
    assert y.shape == (batch, seq, cout)
    assert jnp.allclose(y, ref, atol=1e-2, rtol=1e-2), float(jnp.max(jnp.abs(y - ref)))

    # Case 2: ragged M + rank-tiled (multi-K) path, no bias.
    m2, cin2, cout2 = 40, 256, 384
    x2 = jax.random.normal(k3, (m2, cin2), jnp.float32)
    vt2, u2, _ = init_lr_linear_params(k4, cin2, cout2)
    y2 = jax.block_until_ready(lr_linear_super(x2, vt2, u2, None, tnc_max=128))
    ref2 = _ref_forward(x2, vt2, u2, None)
    assert y2.shape == (m2, cout2)
    assert jnp.allclose(y2, ref2, atol=1e-2, rtol=1e-2), float(jnp.max(jnp.abs(y2 - ref2)))

    print("KERNEL_OK")
</pallas_src>

<mosaic_0001>
module attributes {stable_mosaic.version = 11 : i64} {
  func.func @_lr_kernel_fused(%arg0: i32, %arg1: memref<16x128xf32, #tpu.memory_space<vmem>>, %arg2: memref<128x128xf32, #tpu.memory_space<vmem>>, %arg3: memref<128x128xf32, #tpu.memory_space<vmem>>, %arg4: memref<1x128xf32, #tpu.memory_space<vmem>>, %arg5: memref<16x128xf32, #tpu.memory_space<vmem>>) attributes {dimension_semantics = [#tpu.dimension_semantics<parallel>], iteration_bounds = array<i64: 1>, scalar_prefetch = 0 : i64, scratch_operands = 0 : i64, tpu.core_type = #tpu.core_type<tc>, window_params = [{transform_indices = @transform_0, window_bounds = array<i64: 16, 128>}, {pipeline_mode = #tpu.pipeline_mode<synchronous>, transform_indices = @transform_1, window_bounds = array<i64: 128, 128>}, {pipeline_mode = #tpu.pipeline_mode<synchronous>, transform_indices = @transform_2, window_bounds = array<i64: 128, 128>}, {pipeline_mode = #tpu.pipeline_mode<synchronous>, transform_indices = @transform_3, window_bounds = array<i64: 1, 128>}, {transform_indices = @transform_4, window_bounds = array<i64: 16, 128>}]} {
    %c0 = arith.constant 0 : index
    %c0_0 = arith.constant 0 : index
    %0 = vector.load %arg1[%c0, %c0_0] : memref<16x128xf32, #tpu.memory_space<vmem>>, vector<16x128xf32>
    %c0_1 = arith.constant 0 : index
    %c0_2 = arith.constant 0 : index
    %1 = vector.load %arg2[%c0_1, %c0_2] : memref<128x128xf32, #tpu.memory_space<vmem>>, vector<128x128xf32>
    %cst = arith.constant dense<0.000000e+00> : vector<16x128xf32>
    %2 = tpu.matmul %0, %1, %cst {dimension_numbers = #tpu.dot_dimension_numbers<[1], [0], [0], [1], [0, 0, 1, 1], [], []>} : vector<16x128xf32>, vector<128x128xf32>, vector<16x128xf32> -> vector<16x128xf32>
    %c0_3 = arith.constant 0 : index
    %c0_4 = arith.constant 0 : index
    %3 = vector.load %arg3[%c0_3, %c0_4] : memref<128x128xf32, #tpu.memory_space<vmem>>, vector<128x128xf32>
    %cst_5 = arith.constant dense<0.000000e+00> : vector<16x128xf32>
    %4 = tpu.matmul %2, %3, %cst_5 {dimension_numbers = #tpu.dot_dimension_numbers<[1], [0], [0], [1], [0, 0, 1, 1], [], []>} : vector<16x128xf32>, vector<128x128xf32>, vector<16x128xf32> -> vector<16x128xf32>
    %c0_6 = arith.constant 0 : index
    %c0_7 = arith.constant 0 : index
    %5 = vector.load %arg4[%c0_6, %c0_7] : memref<1x128xf32, #tpu.memory_space<vmem>>, vector<1x128xf32>
    %6 = vector.broadcast %5 : vector<1x128xf32> to vector<16x128xf32>
    %7 = arith.addf %4, %6 : vector<16x128xf32>
    %c0_8 = arith.constant 0 : index
    %c0_9 = arith.constant 0 : index
    %8 = vector.load %arg5[%c0_8, %c0_9] : memref<16x128xf32, #tpu.memory_space<vmem>>, vector<16x128xf32>
    tpu.vector_store %arg5[%c0_8, %c0_9], %7 {strides = array<i32>} : memref<16x128xf32, #tpu.memory_space<vmem>>, vector<16x128xf32>,
    return
  }
  func.func @transform_0(%arg0: i32) -> (i32, i32) {
    %c0_i32 = arith.constant 0 : i32
    %c0_i32_0 = arith.constant 0 : i32
    return %arg0, %c0_i32 : i32, i32
  }
  func.func @transform_1(%arg0: i32) -> (i32, i32) {
    %c0_i32 = arith.constant 0 : i32
    %c0_i32_0 = arith.constant 0 : i32
    %c0_i32_1 = arith.constant 0 : i32
    return %c0_i32, %c0_i32_0 : i32, i32
  }
  func.func @transform_2(%arg0: i32) -> (i32, i32) {
    %c0_i32 = arith.constant 0 : i32
    %c0_i32_0 = arith.constant 0 : i32
    %c0_i32_1 = arith.constant 0 : i32
    return %c0_i32, %c0_i32_0 : i32, i32
  }
  func.func @transform_3(%arg0: i32) -> (i32, i32) {
    %c0_i32 = arith.constant 0 : i32
    %c0_i32_0 = arith.constant 0 : i32
    %c0_i32_1 = arith.constant 0 : i32
    return %c0_i32, %c0_i32_0 : i32, i32
  }
  func.func @transform_4(%arg0: i32) -> (i32, i32) {
    %c0_i32 = arith.constant 0 : i32
    %c0_i32_0 = arith.constant 0 : i32
    return %arg0, %c0_i32 : i32, i32
  }
}

</mosaic_0001>

<llo_original>
// kernel: tpu_custom_call.1
$region0: #{tpu_custom_call.1}
  #allocation0 [shape = 'u32[]', space=smem, size = 0x4, offset = 0x4, fixed_abs, tag = 'smem constant byte address 0x4 - core index']
  #allocation1 [shape = 'u32[72,128]{1,0:T(1,128)}', space=vmem, size = 0x9000, scoped, tag = 'internal scratch']
  %s0 = inlined_call_operand.hbm [shape: f32[16,128], index: 0, kind: input, shape index: {}]
  %s1 = inlined_call_operand.hbm [shape: f32[128,128], index: 1, kind: input, shape index: {}]
  %s2 = inlined_call_operand.hbm [shape: f32[128,128], index: 2, kind: input, shape index: {}]
  %s3 = inlined_call_operand.vmem [shape: f32[1,128], index: 3, kind: input, shape index: {}]
  %s4 = inlined_call_operand.hbm [shape: f32[16,128], index: 4, kind: output, shape index: {}]
  %s5 = sld [smem:[#allocation0]]
  $region38: #{tpu_custom_call.1} parent=0
    _
  %s7 = ssub.s32 1, %s5
  %s8 = scalar_select 0, %s7, %s5
  $region1: #{tpu_custom_call.1} parent=0
    #allocation2 [shape = 'u8[8192]{0}', space=vmem, size = 0x2000, scoped, tag = 'input window, operand 0, single buffered']
    #allocation3 [shape = 's32[1]{0}', space=sflag, size = 0x4, scoped, tag = 'scoped memory for tpu_custom_call.1']
    #allocation4 [shape = 's32[1]{0}', space=sflag, size = 0x4, scoped, tag = 'scoped memory for tpu_custom_call.1']
    #allocation5 [shape = 'u8[65536]{0}', space=vmem, size = 0x10000, scoped, tag = 'input window, operand 1, single buffered']
    #allocation6 [shape = 's32[1]{0}', space=sflag, size = 0x4, scoped, tag = 'scoped memory for tpu_custom_call.1']
    #allocation7 [shape = 'u8[65536]{0}', space=vmem, size = 0x10000, scoped, tag = 'input window, operand 2, single buffered']
    #allocation8 [shape = 'u8[8192]{0}', space=vmem, size = 0x2000, scoped, tag = 'output window, operand 0, single buffered']
    %9 = vsyncpa [#allocation3], 0
    %10 = vsyncpa [#allocation6], 0
    %11 = vsyncpa [#allocation4], 0
    // Predicated region
    $region2: #{tpu_custom_call.1} parent=1 // pred_check
      _
    $region3: #{tpu_custom_call.1} parent=1 // pred_check_branch
      %13 = sbr.rel (0) target = $region5
    $region4: #{tpu_custom_call.1} parent=1 // pred_region
      %15 = vsyncadd [#allocation3], 0
      %s16 = sshll.u32 %s0, 4
      %s17 = int_to_ptr.hbm [resolvable:$true] %s16
      %s18 = sshll.u32 [#allocation2], 4
      %s19 = int_to_ptr.vmem [resolvable:$true] %s18
      %24 = dma.hbm_to_vmem [thread:$0]  %s17, 256, %s19, [#allocation3], 128, 128, 8
    $region5: #{tpu_custom_call.1} parent=1 // pred_fallthru
      _
    // Predicated region
    $region6: #{tpu_custom_call.1} parent=1 // pred_check
      _
    $region7: #{tpu_custom_call.1} parent=1 // pred_check_branch
      %26 = sbr.rel (0) target = $region9
    $region8: #{tpu_custom_call.1} parent=1 // pred_region
      %28 = vsyncadd [#allocation6], 0
      %s29 = sshll.u32 %s1, 4
      %s30 = int_to_ptr.hbm [resolvable:$true] %s29
      %s31 = sshll.u32 [#allocation5], 4
      %s32 = int_to_ptr.vmem [resolvable:$true] %s31
      %37 = dma.hbm_to_vmem [thread:$0]  %s30, 2048, %s32, [#allocation6], 128, 128, 8
    $region9: #{tpu_custom_call.1} parent=1 // pred_fallthru
      _
    // Predicated region
    $region10: #{tpu_custom_call.1} parent=1 // pred_check
      _
    $region11: #{tpu_custom_call.1} parent=1 // pred_check_branch
      %39 = sbr.rel (0) target = $region13
    $region12: #{tpu_custom_call.1} parent=1 // pred_region
      %41 = vsyncadd [#allocation6], 0
      %s42 = sshll.u32 %s2, 4
      %s43 = int_to_ptr.hbm [resolvable:$true] %s42
      %s44 = sshll.u32 [#allocation7], 4
      %s45 = int_to_ptr.vmem [resolvable:$true] %s44
      %50 = dma.hbm_to_vmem [thread:$0]  %s43, 2048, %s45, [#allocation6], 128, 128, 8
    $region13: #{tpu_custom_call.1} parent=1 // pred_fallthru
      _
    // Predicated region
    $region14: #{tpu_custom_call.1} parent=1 // pred_check
      _
    $region15: #{tpu_custom_call.1} parent=1 // pred_check_branch
      %52 = sbr.rel (0) target = $region17
    $region16: #{tpu_custom_call.1} parent=1 // pred_region
      _
    $region17: #{tpu_custom_call.1} parent=1 // pred_fallthru
      _
    // Predicated region
    $region18: #{tpu_custom_call.1} parent=1 // pred_check
      _
    $region19: #{tpu_custom_call.1} parent=1 // pred_check_branch
      %54 = sbr.rel (0) target = $region21
    $region20: #{tpu_custom_call.1} parent=1 // pred_region
      %56 = dma.done [#allocation3], 256
    $region21: #{tpu_custom_call.1} parent=1 // pred_fallthru
      _
    // Predicated region
    $region22: #{tpu_custom_call.1} parent=1 // pred_check
      _
    $region23: #{tpu_custom_call.1} parent=1 // pred_check_branch
      %58 = sbr.rel (0) target = $region25
    $region24: #{tpu_custom_call.1} parent=1 // pred_region
      %60 = dma.done [#allocation6], 2048
    $region25: #{tpu_custom_call.1} parent=1 // pred_fallthru
      _
    // Predicated region
    $region26: #{tpu_custom_call.1} parent=1 // pred_check
      _
    $region27: #{tpu_custom_call.1} parent=1 // pred_check_branch
      %62 = sbr.rel (0) target = $region29
    $region28: #{tpu_custom_call.1} parent=1 // pred_region
      %64 = dma.done [#allocation6], 2048
    $region29: #{tpu_custom_call.1} parent=1 // pred_fallthru
      _
    %v65 = vld [vmem:[#allocation2] sm:$0xff]
    %v66 = vld [vmem:[#allocation2 + $0x8] sm:$0xff]
    %v67 = vld [vmem:[#allocation5] sm:$0xff]
    %v68 = vld [vmem:[#allocation5 + $0x8] sm:$0xff]
    %v69 = vld [vmem:[#allocation5 + $0x10] sm:$0xff]
    %v70 = vld [vmem:[#allocation5 + $0x18] sm:$0xff]
    %v71 = vld [vmem:[#allocation5 + $0x20] sm:$0xff]
    %v72 = vld [vmem:[#allocation5 + $0x28] sm:$0xff]
    %v73 = vld [vmem:[#allocation5 + $0x30] sm:$0xff]
    %v74 = vld [vmem:[#allocation5 + $0x38] sm:$0xff]
    %v75 = vld [vmem:[#allocation5 + $0x40] sm:$0xff]
    %v76 = vld [vmem:[#allocation5 + $0x48] sm:$0xff]
    %v77 = vld [vmem:[#allocation5 + $0x50] sm:$0xff]
    %v78 = vld [vmem:[#allocation5 + $0x58] sm:$0xff]
    %v79 = vld [vmem:[#allocation5 + $0x60] sm:$0xff]
    %v80 = vld [vmem:[#allocation5 + $0x68] sm:$0xff]
    %v81 = vld [vmem:[#allocation5 + $0x70] sm:$0xff]
    %v82 = vld [vmem:[#allocation5 + $0x78] sm:$0xff]
    %83 = vmatpush.msra.mxu0 %v82
    %84 = vmatpush.msra.mxu0 %v81
    %85 = vmatpush.msra.mxu0 %v80
    %86 = vmatpush.msra.mxu0 %v79
    %87 = vmatpush.msra.mxu0 %v78
    %88 = vmatpush.msra.mxu0 %v77
    %89 = vmatpush.msra.mxu0 %v76
    %90 = vmatpush.msra.mxu0 %v75
    %91 = vmatpush.msra.mxu0 %v74
    %92 = vmatpush.msra.mxu0 %v73
    %93 = vmatpush.msra.mxu0 %v72
    %94 = vmatpush.msra.mxu0 %v71
    %95 = vmatpush.msra.mxu0 %v70
    %96 = vmatpush.msra.mxu0 %v69
    %97 = vmatpush.msra.mxu0 %v68
    %98 = vmatpush.msra.mxu0 %v67
    %99 = vmatmul.f32.gmra.mxu0 %v65
    %v100 = vpop.f32.mrf.mxu0
    %v101 = vadd.f32 0.0, %v100
    %102 = vmatmul.f32.gmra.mxu0 %v66
    %v103 = vpop.f32.mrf.mxu0
    %v104 = vadd.f32 0.0, %v103
    %105 = vdwg.mxu0
    %v106 = vld [vmem:[#allocation7] sm:$0xff]
    %v107 = vld [vmem:[#allocation7 + $0x8] sm:$0xff]
    %v108 = vld [vmem:[#allocation7 + $0x10] sm:$0xff]
    %v109 = vld [vmem:[#allocation7 + $0x18] sm:$0xff]
    %v110 = vld [vmem:[#allocation7 + $0x20] sm:$0xff]
    %v111 = vld [vmem:[#allocation7 + $0x28] sm:$0xff]
    %v112 = vld [vmem:[#allocation7 + $0x30] sm:$0xff]
    %v113 = vld [vmem:[#allocation7 + $0x38] sm:$0xff]
    %v114 = vld [vmem:[#allocation7 + $0x40] sm:$0xff]
    %v115 = vld [vmem:[#allocation7 + $0x48] sm:$0xff]
    %v116 = vld [vmem:[#allocation7 + $0x50] sm:$0xff]
    %v117 = vld [vmem:[#allocation7 + $0x58] sm:$0xff]
    %v118 = vld [vmem:[#allocation7 + $0x60] sm:$0xff]
    %v119 = vld [vmem:[#allocation7 + $0x68] sm:$0xff]
    %v120 = vld [vmem:[#allocation7 + $0x70] sm:$0xff]
    %v121 = vld [vmem:[#allocation7 + $0x78] sm:$0xff]
    %v122 = vld [vmem:[%s3] sm:$0x1]
    %v124 = vperm.slane %v122, 0
    %126 = vmatpush.msra.mxu0 %v121
    %127 = vmatpush.msra.mxu0 %v120
    %128 = vmatpush.msra.mxu0 %v119
    %129 = vmatpush.msra.mxu0 %v118
    %130 = vmatpush.msra.mxu0 %v117
    %131 = vmatpush.msra.mxu0 %v116
    %132 = vmatpush.msra.mxu0 %v115
    %133 = vmatpush.msra.mxu0 %v114
    %134 = vmatpush.msra.mxu0 %v113
    %135 = vmatpush.msra.mxu0 %v112
    %136 = vmatpush.msra.mxu0 %v111
    %137 = vmatpush.msra.mxu0 %v110
    %138 = vmatpush.msra.mxu0 %v109
    %139 = vmatpush.msra.mxu0 %v108
    %140 = vmatpush.msra.mxu0 %v107
    %141 = vmatpush.msra.mxu0 %v106
    %142 = vmatmul.f32.gmra.mxu0 %v101
    %v143 = vpop.f32.mrf.mxu0
    %v144 = vadd.f32 %v124, %v143
    %145 = vmatmul.f32.gmra.mxu0 %v104
    %v146 = vpop.f32.mrf.mxu0
    %v147 = vadd.f32 %v124, %v146
    %148 = vdwg.mxu0
    %149 = vst [vmem:[#allocation8] sm:$0xff] %v144
    %150 = vst [vmem:[#allocation8 + $0x8] sm:$0xff] %v147
    // Predicated region
    $region30: #{tpu_custom_call.1} parent=1 // pred_check
      _
    $region31: #{tpu_custom_call.1} parent=1 // pred_check_branch
      %152 = sbr.rel (0) target = $region33
    $region32: #{tpu_custom_call.1} parent=1 // pred_region
      %154 = vsyncadd [#allocation4], 0
      %s155 = sshll.u32 [#allocation8], 4
      %s156 = int_to_ptr.vmem [resolvable:$true] %s155
      %s157 = sshll.u32 %s4, 4
      %s158 = int_to_ptr.hbm [resolvable:$true] %s157
      %163 = dma.vmem_to_hbm [thread:$0]  %s156, 256, %s158, [#allocation4], 128, 128, 8
    $region33: #{tpu_custom_call.1} parent=1 // pred_fallthru
      _
    // Predicated region
    $region34: #{tpu_custom_call.1} parent=1 // pred_check
      _
    $region35: #{tpu_custom_call.1} parent=1 // pred_check_branch
      %165 = sbr.rel (0) target = $region37
    $region36: #{tpu_custom_call.1} parent=1 // pred_region
      %167 = dma.done [#allocation4], 256
    $region37: #{tpu_custom_call.1} parent=1 // pred_fallthru
      _
    %168 = vsyncpa [#allocation3], 1
    %169 = vsyncpa [#allocation6], 1
    %170 = vsyncpa [#allocation4], 1

</llo_original>
